<compile_context>
chip_gen: v7x
topology: tpu7x:2x2x1
jax: 0.10.0
libtpu: 0.0.40
codegen_flags: <defaults>
</compile_context>

<pallas_src>
import jax
import jax.numpy as jnp
from jax.experimental import pallas as pl
from jax.experimental.pallas import tpu as pltpu

_LANE = 128
_MAX_COLS = 1024                 # lane-dense last dim, capped so tiles stay modest
_TILE_BYTES = 4 * 1024 * 1024    # per-buffer budget; 4 buffers -> 16 MiB pipeline
_VMEM_LIMIT = 32 * 1024 * 1024   # safe on v5e/v6e/v7x (raises v5e's 16 MiB default)
_TINY_ELEMENTS = 64 * 1024       # below this the Pallas launch can't beat XLA fusion


def _base_module_kernel(dummy_ref, x_ref, o_ref):
    # dummy_ref: (1,) scalar parameter in SMEM (the module's dummy_tensor)
    # x_ref / o_ref: (tile_rows, cols) VMEM tiles
    scale = dummy_ref[0]                 # scalar read once per grid step
    o_ref[...] = x_ref[...] * scale


def _sublane_multiple(itemsize):
    # Packed sublane multiple per dtype width: f32 -> 8, bf16 -> 16, int8/fp8 -> 32.
    return {4: 8, 2: 16, 1: 32}.get(itemsize, 8)


def _choose_cols(total):
    """Largest lane-dense (multiple-of-128) column count dividing `total`."""
    for cols in (_MAX_COLS, 512, 256, _LANE):
        if total % cols == 0:
            return cols
    return None


def _pick_tile_rows(rows, cols, itemsize, requested=None):
    """Row-tile size: sublane-aligned, >= ~4 pipeline steps, divisor of rows if possible."""
    sub = _sublane_multiple(itemsize)
    if requested is not None:
        tr = min(int(requested), rows)
        if tr < rows:
            tr = max(sub, (tr // sub) * sub)
        return tr
    # Per-buffer byte budget.
    budget = max(sub, _TILE_BYTES // (cols * itemsize))
    # Guarantee >= 4 grid steps when the slab is big enough to pipeline.
    if rows >= 4 * sub:
        budget = min(budget, max(sub, rows // 4))
    if budget >= rows:
        return rows                       # single full-extent block (always legal)
    tr = max(sub, (budget // sub) * sub)
    # Prefer a divisor of rows: every step is a full, unmasked tile (no tail).
    for cand in range(tr, sub - 1, -sub):
        if rows % cand == 0:
            return cand
    return tr


def _concrete_scalar(a):
    """Return the Python float value of `a` if it is concrete, else None."""
    try:
        return float(jax.device_get(jnp.asarray(a).reshape(())))
    except Exception:
        return None


def _run_slab(x2d, dummy, tile_rows):
    rows, cols = x2d.shape
    grid = (pl.cdiv(rows, tile_rows),)
    return pl.pallas_call(
        _base_module_kernel,
        out_shape=jax.ShapeDtypeStruct((rows, cols), x2d.dtype),
        grid=grid,
        in_specs=[
            pl.BlockSpec(memory_space=pltpu.SMEM),               # dummy scalar
            pl.BlockSpec((tile_rows, cols), lambda i: (i, 0)),   # lane-dense row tile
        ],
        out_specs=pl.BlockSpec((tile_rows, cols), lambda i: (i, 0)),
        input_output_aliases={1: 0},   # elementwise: output may reuse x's HBM buffer
        compiler_params=pltpu.CompilerParams(
            dimension_semantics=("parallel",),   # independent row tiles (megacore on v7x)
            vmem_limit_bytes=_VMEM_LIMIT,
        ),
    )(dummy, x2d)


def base_module_forward(x_nchw, dummy_tensor, *, tile_rows=None, force_pallas=False):
    """Elementwise pass-through scaled by the module's dummy parameter.

    x_nchw: (N, C, H, W) activations
    dummy_tensor: (1,) float32 (initialized to ones, as in BaseModule.__init__)
    """
    n, c, h, w = x_nchw.shape
    total = n * c * h * w
    dummy = dummy_tensor.reshape(1).astype(x_nchw.dtype)

    # Constant-fold: BaseModule's dummy_tensor is never meaningfully trained; if it
    # is concrete and exactly 1.0 the whole kernel is a no-op -> skip the HBM pass.
    if not force_pallas:
        dv = _concrete_scalar(dummy)
        if dv == 1.0:
            return x_nchw
        # Tiny inputs are pure launch + per-step overhead; let XLA fuse them.
        if total < _TINY_ELEMENTS:
            return x_nchw * dummy[0]

    itemsize = jnp.dtype(x_nchw.dtype).itemsize
    cols = _choose_cols(total)

    if cols is not None:
        rows = total // cols
        x2d = x_nchw.reshape(rows, cols)
        tr = _pick_tile_rows(rows, cols, itemsize, tile_rows)
        out2d = _run_slab(x2d, dummy, tr)
        return out2d.reshape(n, c, h, w)

    # Pad-and-slice path: total not divisible by 128 -> pad the flat vector to a
    # lane-dense (rows, 128) slab, run the same kernel, slice back.
    flat = x_nchw.reshape(total)
    padded = ((total + _LANE - 1) // _LANE) * _LANE
    flat_p = jnp.pad(flat, (0, padded - total))
    rows = padded // _LANE
    x2d = flat_p.reshape(rows, _LANE)
    tr = _pick_tile_rows(rows, _LANE, itemsize, tile_rows)
    out2d = _run_slab(x2d, dummy, tr)
    return out2d.reshape(padded)[:total].reshape(n, c, h, w)


if __name__ == "__main__":
    dummy_tensor = jnp.ones((1,), dtype=jnp.float32)  # exactly as in BaseModule.__init__

    # 1) Small NCHW input consistent with a CNN module: batch=2, channels=4, spatial=16.
    #    force_pallas=True exercises the kernel (single full-extent block path).
    x_small = jax.random.normal(jax.random.PRNGKey(0), (2, 4, 16, 16), dtype=jnp.float32)
    y_small = jax.block_until_ready(base_module_forward(x_small, dummy_tensor, force_pallas=True))
    assert y_small.shape == x_small.shape
    assert jnp.allclose(y_small, x_small), "mismatch vs. reference pass-through (small)"

    # 2) Constant-fold fast path: dummy is concrete 1.0 -> kernel skipped entirely.
    y_fold = jax.block_until_ready(base_module_forward(x_small, dummy_tensor))
    assert jnp.allclose(y_fold, x_small), "mismatch vs. reference pass-through (folded)"

    # 3) Mid-sized slab exercising the multi-step, double-buffered grid path:
    #    (8,16,32,32) -> (128, 1024) slab, auto tile_rows=32 -> 4 pipelined steps.
    x_mid = jax.random.normal(jax.random.PRNGKey(0), (8, 16, 32, 32), dtype=jnp.float32)
    y_mid = jax.block_until_ready(base_module_forward(x_mid, dummy_tensor, force_pallas=True))
    assert y_mid.shape == x_mid.shape
    assert jnp.allclose(y_mid, x_mid), "mismatch vs. reference pass-through (tiled)"

    # 4) Non-128-divisible total exercising the pad-and-slice lane-dense path.
    x_odd = jax.random.normal(jax.random.PRNGKey(0), (2, 3, 5, 7), dtype=jnp.float32)
    y_odd = jax.block_until_ready(base_module_forward(x_odd, dummy_tensor, force_pallas=True))
    assert y_odd.shape == x_odd.shape
    assert jnp.allclose(y_odd, x_odd), "mismatch vs. reference pass-through (padded)"

    print("KERNEL_OK")
</pallas_src>

<mosaic_0001>
module attributes {stable_mosaic.version = 11 : i64} {
  func.func @_base_module_kernel(%arg0: i32, %arg1: memref<1xf32, #tpu.memory_space<smem>>, %arg2: memref<2x1024xf32, #tpu.memory_space<vmem>>, %arg3: memref<2x1024xf32, #tpu.memory_space<vmem>>) attributes {dimension_semantics = [#tpu.dimension_semantics<parallel>], iteration_bounds = array<i64: 1>, scalar_prefetch = 0 : i64, scratch_operands = 0 : i64, tpu.core_type = #tpu.core_type<tc>, window_params = [{transform_indices = @transform_0, window_bounds = array<i64: 1>}, {transform_indices = @transform_1, window_bounds = array<i64: 2, 1024>}, {transform_indices = @transform_2, window_bounds = array<i64: 2, 1024>}]} {
    %c0 = arith.constant 0 : index
    %0 = memref.load %arg1[%c0] : memref<1xf32, #tpu.memory_space<smem>>
    %c0_0 = arith.constant 0 : index
    %c0_1 = arith.constant 0 : index
    %1 = vector.load %arg2[%c0_0, %c0_1] : memref<2x1024xf32, #tpu.memory_space<vmem>>, vector<2x1024xf32>
    %2 = vector.broadcast %0 : f32 to vector<2x1024xf32>
    %3 = arith.mulf %1, %2 : vector<2x1024xf32>
    %c0_2 = arith.constant 0 : index
    %c0_3 = arith.constant 0 : index
    %4 = vector.load %arg3[%c0_2, %c0_3] : memref<2x1024xf32, #tpu.memory_space<vmem>>, vector<2x1024xf32>
    tpu.vector_store %arg3[%c0_2, %c0_3], %3 {strides = array<i32>} : memref<2x1024xf32, #tpu.memory_space<vmem>>, vector<2x1024xf32>,
    return
  }
  func.func @transform_0(%arg0: i32) -> i32 {
    %c0_i32 = arith.constant 0 : i32
    %c0_i32_0 = arith.constant 0 : i32
    return %c0_i32 : i32
  }
  func.func @transform_1(%arg0: i32) -> (i32, i32) {
    %c0_i32 = arith.constant 0 : i32
    %c0_i32_0 = arith.constant 0 : i32
    return %arg0, %c0_i32 : i32, i32
  }
  func.func @transform_2(%arg0: i32) -> (i32, i32) {
    %c0_i32 = arith.constant 0 : i32
    %c0_i32_0 = arith.constant 0 : i32
    return %arg0, %c0_i32 : i32, i32
  }
}

</mosaic_0001>

<llo_original>
// kernel: tpu_custom_call.1
$region0: #{tpu_custom_call.1}
  #allocation0 [shape = 'u32[]', space=smem, size = 0x4, offset = 0x4, fixed_abs, tag = 'smem constant byte address 0x4 - core index']
  #allocation1 [shape = 'u32[144,128]{1,0:T(1,128)}', space=vmem, size = 0x12000, scoped, tag = 'internal scratch']
  #allocation2 [shape = 'f32[1]{0:T(128)S(6)}', space=smem, size = 0x200, scoped, tag = 'scoped memory for tpu_custom_call.1']
  %s0 = inlined_call_operand.<no memory space> [shape: f32[1], index: 0, kind: input, shape index: {}]
  %s1 = inlined_call_operand.hbm [shape: f32[2,1024], index: 1, kind: input, shape index: {}, may-alias: {1,2}]
  %s2 = inlined_call_operand.hbm [shape: f32[2,1024], index: 2, kind: output, shape index: {}, may-alias: {1,2}]
  %s3 = sld [smem:[#allocation0]]
  $region22: #{tpu_custom_call.1} parent=0
    _
  %s5 = ssub.s32 1, %s3
  %s6 = scalar_select 0, %s5, %s3
  %7 = sst [smem:[#allocation2]] %s0
  $region1: #{tpu_custom_call.1} parent=0
    #allocation3 [shape = 'u8[8192]{0}', space=vmem, size = 0x2000, scoped, tag = 'input window, operand 1, single buffered']
    #allocation4 [shape = 's32[1]{0}', space=sflag, size = 0x4, scoped, tag = 'scoped memory for tpu_custom_call.1']
    #allocation5 [shape = 's32[1]{0}', space=sflag, size = 0x4, scoped, tag = 'scoped memory for tpu_custom_call.1']
    #allocation6 [shape = 'u8[8192]{0}', space=vmem, size = 0x2000, scoped, tag = 'output window, operand 0, single buffered']
    %8 = vsyncpa [#allocation4], 0
    %9 = vsyncpa [#allocation5], 0
    // Predicated region
    $region2: #{tpu_custom_call.1} parent=1 // pred_check
      _
    $region3: #{tpu_custom_call.1} parent=1 // pred_check_branch
      %11 = sbr.rel (0) target = $region5
    $region4: #{tpu_custom_call.1} parent=1 // pred_region
      _
    $region5: #{tpu_custom_call.1} parent=1 // pred_fallthru
      _
    // Predicated region
    $region6: #{tpu_custom_call.1} parent=1 // pred_check
      _
    $region7: #{tpu_custom_call.1} parent=1 // pred_check_branch
      %13 = sbr.rel (0) target = $region9
    $region8: #{tpu_custom_call.1} parent=1 // pred_region
      %s15 = ssub.s32 256, 256
      %16 = vsyncadd [#allocation4], %s15
      %s18 = sshll.u32 [#allocation3], 4
      %s19 = int_to_ptr.vmem [resolvable:$true] %s18
      %21 = dma.hbm_to_vmem [thread:$0]  %s1, 256, %s19, [#allocation4]
    $region9: #{tpu_custom_call.1} parent=1 // pred_fallthru
      _
    // Predicated region
    $region10: #{tpu_custom_call.1} parent=1 // pred_check
      _
    $region11: #{tpu_custom_call.1} parent=1 // pred_check_branch
      %23 = sbr.rel (0) target = $region13
    $region12: #{tpu_custom_call.1} parent=1 // pred_region
      %24 = dma.done [#allocation4], 256
    $region13: #{tpu_custom_call.1} parent=1 // pred_fallthru
      _
    %s25 = sld [smem:[#allocation2]]
    %v26 = vld [vmem:[#allocation3] sm:$0xff]
    %v27 = vld [vmem:[#allocation3 + $0x8] sm:$0xff]
    %v28 = vstv %s25
    %v29 = vmul.f32 %v26, %v28
    %v30 = vmul.f32 %v27, %v28
    %31 = vst [vmem:[#allocation6] sm:$0xff] %v29
    %32 = vst [vmem:[#allocation6 + $0x8] sm:$0xff] %v30
    // Predicated region
    $region14: #{tpu_custom_call.1} parent=1 // pred_check
      _
    $region15: #{tpu_custom_call.1} parent=1 // pred_check_branch
      %34 = sbr.rel (0) target = $region17
    $region16: #{tpu_custom_call.1} parent=1 // pred_region
      %s36 = ssub.s32 256, 256
      %37 = vsyncadd [#allocation5], %s36
      %s39 = sshll.u32 [#allocation6], 4
      %s40 = int_to_ptr.vmem [resolvable:$true] %s39
      %42 = dma.vmem_to_hbm [thread:$0]  %s40, 256, %s2, [#allocation5]
    $region17: #{tpu_custom_call.1} parent=1 // pred_fallthru
      _
    // Predicated region
    $region18: #{tpu_custom_call.1} parent=1 // pred_check
      _
    $region19: #{tpu_custom_call.1} parent=1 // pred_check_branch
      %44 = sbr.rel (0) target = $region21
    $region20: #{tpu_custom_call.1} parent=1 // pred_region
      %45 = dma.done [#allocation5], 256
    $region21: #{tpu_custom_call.1} parent=1 // pred_fallthru
      _
    %46 = vsyncpa [#allocation4], 1
    %47 = vsyncpa [#allocation5], 1

</llo_original>
